<compile_context>
chip_gen: v7x
topology: tpu7x:2x2x1
jax: 0.10.0
libtpu: 0.0.40
codegen_flags: <defaults>
</compile_context>

<pallas_src>
import jax
import jax.numpy as jnp
from jax.experimental import pallas as pl
from jax.experimental.pallas import tpu as pltpu


def _copy_kernel(x_ref, o_ref):
    # Input and output blocks are identical shapes: pure block copy.
    o_ref[...] = x_ref[...]


def _round_up(v: int, m: int) -> int:
    return ((v + m - 1) // m) * m


def remove_trail(x: jax.Array, trail_size: int) -> jax.Array:
    """Drop the last `trail_size` positions along the last axis of (N, C, L)."""
    n, c, l = x.shape
    if trail_size == 0:
        # PyTorch module with trail_size == 0 would be a no-op slice.
        return x
    assert 0 < trail_size < l, "trail_size must be in [0, L)"
    l_out = l - trail_size

    # (N, C) are just rows for a last-axis slice: collapse them.
    rows = n * c
    x2d = x.reshape(rows, l)

    itemsize = jnp.dtype(x.dtype).itemsize
    sublane = {4: 8, 2: 16, 1: 32}.get(itemsize, 8)

    # Lane-dense tiles: multiple of 128 lanes (aim 512-1024 for big L_out),
    # sublane-multiple rows.  Per-tile bytes stay <= ~1 MiB, so even with
    # double-buffered input + output (~4x tile) we are far below v7x's 64 MiB
    # VMEM and the default scoped limits on all generations.
    tl = min(_round_up(l_out, 128), 1024)
    tr = min(_round_up(rows, sublane), 256)

    grid = (pl.cdiv(rows, tr), pl.cdiv(l_out, tl))

    y2d = pl.pallas_call(
        _copy_kernel,
        out_shape=jax.ShapeDtypeStruct((rows, l_out), x.dtype),
        grid=grid,
        # Identity index maps + identical block shapes: trail columns beyond
        # L_out are never read (only the masked remainder of the final ragged
        # lane tile touches a few extra columns, and its writes are dropped).
        in_specs=[pl.BlockSpec((tr, tl), lambda i, j: (i, j))],
        out_specs=pl.BlockSpec((tr, tl), lambda i, j: (i, j)),
        compiler_params=pltpu.CompilerParams(
            dimension_semantics=("parallel", "parallel"),
        ),
        cost_estimate=pl.CostEstimate(
            flops=0,
            transcendentals=0,
            bytes_accessed=2 * rows * l_out * itemsize,
        ),
    )(x2d)

    return y2d.reshape(n, c, l_out)


if __name__ == "__main__":
    key = jax.random.PRNGKey(0)
    N, C, L = 2, 4, 16
    trail_size = 3

    x = jax.random.normal(key, (N, C, L), dtype=jnp.float32)

    y = remove_trail(x, trail_size)
    y = jax.block_until_ready(y)

    # Reference: plain JAX slice (mirrors x[:, :, :-trail_size].contiguous()).
    y_ref = x[:, :, :-trail_size]

    assert y.shape == (N, C, L - trail_size), y.shape
    assert jnp.array_equal(y, y_ref), "Pallas RemoveTrail mismatch vs reference"

    print("KERNEL_OK")
</pallas_src>

<mosaic_0001>
module attributes {stable_mosaic.version = 11 : i64} {
  func.func @_copy_kernel(%arg0: i32, %arg1: i32, %arg2: memref<8x128xf32, #tpu.memory_space<vmem>>, %arg3: memref<8x128xf32, #tpu.memory_space<vmem>>) attributes {dimension_semantics = [#tpu.dimension_semantics<parallel>, #tpu.dimension_semantics<parallel>], iteration_bounds = array<i64: 1, 1>, scalar_prefetch = 0 : i64, scratch_operands = 0 : i64, tpu.core_type = #tpu.core_type<tc>, window_params = [{transform_indices = @transform_0, window_bounds = array<i64: 8, 128>}, {transform_indices = @transform_1, window_bounds = array<i64: 8, 128>}]} {
    %c0 = arith.constant 0 : index
    %c0_0 = arith.constant 0 : index
    %0 = vector.load %arg2[%c0, %c0_0] : memref<8x128xf32, #tpu.memory_space<vmem>>, vector<8x128xf32>
    %c0_1 = arith.constant 0 : index
    %c0_2 = arith.constant 0 : index
    %1 = vector.load %arg3[%c0_1, %c0_2] : memref<8x128xf32, #tpu.memory_space<vmem>>, vector<8x128xf32>
    tpu.vector_store %arg3[%c0_1, %c0_2], %0 {strides = array<i32>} : memref<8x128xf32, #tpu.memory_space<vmem>>, vector<8x128xf32>,
    return
  }
  func.func @transform_0(%arg0: i32, %arg1: i32) -> (i32, i32) {
    %c0_i32 = arith.constant 0 : i32
    return %arg0, %arg1 : i32, i32
  }
  func.func @transform_1(%arg0: i32, %arg1: i32) -> (i32, i32) {
    %c0_i32 = arith.constant 0 : i32
    return %arg0, %arg1 : i32, i32
  }
}

</mosaic_0001>

<llo_original>
// kernel: tpu_custom_call.1
$region0: #{tpu_custom_call.1}
  #allocation0 [shape = 'u32[]', space=smem, size = 0x4, offset = 0x4, fixed_abs, tag = 'smem constant byte address 0x4 - core index']
  #allocation1 [shape = 'u32[144,128]{1,0:T(1,128)}', space=vmem, size = 0x12000, scoped, tag = 'internal scratch']
  %s0 = inlined_call_operand.hbm [shape: f32[8,16], index: 0, kind: input, shape index: {}]
  %s1 = inlined_call_operand.hbm [shape: f32[8,13], index: 1, kind: output, shape index: {}]
  %s2 = sld [smem:[#allocation0]]
  $region18: #{tpu_custom_call.1} parent=0
    _
  %s4 = ssub.s32 1, %s2
  %s5 = scalar_select 0, %s4, %s2
  $region1: #{tpu_custom_call.1} parent=0
    #allocation2 [shape = 'u8[4096]{0}', space=vmem, size = 0x1000, scoped, tag = 'input window, operand 0, single buffered']
    #allocation3 [shape = 's32[1]{0}', space=sflag, size = 0x4, scoped, tag = 'scoped memory for tpu_custom_call.1']
    #allocation4 [shape = 's32[1]{0}', space=sflag, size = 0x4, scoped, tag = 'scoped memory for tpu_custom_call.1']
    #allocation5 [shape = 'u8[4096]{0}', space=vmem, size = 0x1000, scoped, tag = 'output window, operand 0, single buffered']
    %6 = vsyncpa [#allocation3], 0
    %7 = vsyncpa [#allocation4], 0
    // Predicated region
    $region2: #{tpu_custom_call.1} parent=1 // pred_check
      _
    $region3: #{tpu_custom_call.1} parent=1 // pred_check_branch
      %9 = sbr.rel (0) target = $region5
    $region4: #{tpu_custom_call.1} parent=1 // pred_region
      %s11 = ssub.s32 128, 128
      %12 = vsyncadd [#allocation3], %s11
      %s14 = sshll.u32 [#allocation2], 4
      %s15 = int_to_ptr.vmem [resolvable:$true] %s14
      %17 = dma.hbm_to_vmem [thread:$0]  %s0, 128, %s15, [#allocation3]
    $region5: #{tpu_custom_call.1} parent=1 // pred_fallthru
      _
    // Predicated region
    $region6: #{tpu_custom_call.1} parent=1 // pred_check
      _
    $region7: #{tpu_custom_call.1} parent=1 // pred_check_branch
      %19 = sbr.rel (0) target = $region9
    $region8: #{tpu_custom_call.1} parent=1 // pred_region
      %20 = dma.done [#allocation3], 128
    $region9: #{tpu_custom_call.1} parent=1 // pred_fallthru
      _
    %v21 = vld [vmem:[#allocation2] sm:$0xff]
    %22 = vst [vmem:[#allocation5] sm:$0xff] %v21
    // Predicated region
    $region10: #{tpu_custom_call.1} parent=1 // pred_check
      _
    $region11: #{tpu_custom_call.1} parent=1 // pred_check_branch
      %24 = sbr.rel (0) target = $region13
    $region12: #{tpu_custom_call.1} parent=1 // pred_region
      %s26 = ssub.s32 128, 128
      %27 = vsyncadd [#allocation4], %s26
      %s29 = sshll.u32 [#allocation5], 4
      %s30 = int_to_ptr.vmem [resolvable:$true] %s29
      %32 = dma.vmem_to_hbm [thread:$0]  %s30, 128, %s1, [#allocation4]
    $region13: #{tpu_custom_call.1} parent=1 // pred_fallthru
      _
    // Predicated region
    $region14: #{tpu_custom_call.1} parent=1 // pred_check
      _
    $region15: #{tpu_custom_call.1} parent=1 // pred_check_branch
      %34 = sbr.rel (0) target = $region17
    $region16: #{tpu_custom_call.1} parent=1 // pred_region
      %35 = dma.done [#allocation4], 128
    $region17: #{tpu_custom_call.1} parent=1 // pred_fallthru
      _
    %36 = vsyncpa [#allocation3], 1
    %37 = vsyncpa [#allocation4], 1

</llo_original>
